<compile_context>
chip_gen: v7x
topology: tpu7x:2x2x1
jax: 0.10.0
libtpu: 0.0.40
codegen_flags: <defaults>
</compile_context>

<pallas_src>
import jax
import jax.numpy as jnp
from jax.experimental import pallas as pl
from jax.experimental.pallas import tpu as pltpu

# ---- problem sizes (small, consistent with the module's __init__ args) ----
B = 2      # batch
S = 8      # word sequence length
DI = 32    # image_feature_dim
DW = 32    # word_feature_dim
DL = 16    # label_feature_dim
DH = 32    # hidden_dim
F = 32     # feature_out_dim
C = 8      # num_classes
T = 6      # timesteps for the fused sequence kernel

OUTW = 128  # packed output lane width: [hidden(F) | scores(C) | zero pad]


def _vmem():
    return pl.BlockSpec(memory_space=pltpu.MemorySpace.VMEM)


# ----------------------------------------------------------------------------
# Shared in-kernel math (VMEM-resident values, all f32)
# ----------------------------------------------------------------------------
def _tca_batched(wordf, wl, sht, n_groups):
    """Temporal-class attention for `n_groups` independent rows.

    wordf : (n_groups * S, DW)  flattened word features (groups on sublanes)
    returns tca : (n_groups, DW)
    """
    f32 = jnp.float32
    oh = jnp.tanh(jnp.dot(wordf, wl, preferred_element_type=f32))    # (G*S, DL)
    attn = jnp.dot(oh, sht, preferred_element_type=f32)              # (G*S, C)
    # Softmax over the sequence axis.  Max-subtraction dropped: tanh output is
    # in [-1, 1], so |attn| <= DL * max|S_h| and exp cannot overflow here.
    # Reshapes split the sublane dim in multiples of S=8 -> tile-aligned.
    e = jnp.exp(attn).reshape(n_groups, S, C)
    denom = jnp.sum(e, axis=1, keepdims=True)                        # (G, 1, C)
    p = e * pl.reciprocal(denom, approx=True)                        # (G, S, C)
    # class-mean folded into the attention weights:
    #   tca[g, :] = sum_s ( (1/C) * sum_c p[g, s, c] ) * word[g, s, :]
    q = jnp.sum(p, axis=2, keepdims=True) * (1.0 / C)                # (G, S, 1)
    word3 = wordf.reshape(n_groups, S, DW)                           # (G, S, DW)
    return jnp.sum(q * word3, axis=1)                                # (G, DW)


def _mlp_tail(pre, w2, b2, w3, b3):
    """relu(pre) -> linear2+relu -> linear3+sigmoid."""
    f32 = jnp.float32
    hidden = jnp.maximum(pre, 0.0)
    feat = jnp.maximum(
        jnp.dot(hidden, w2, preferred_element_type=f32) + b2, 0.0)
    scores = jax.nn.sigmoid(
        jnp.dot(feat, w3, preferred_element_type=f32) + b3)
    return hidden, scores


def _pack_rows(hidden, scores):
    """Single lane-dense slab [hidden | scores | zeros] -> (rows, OUTW)."""
    pad = jnp.zeros((hidden.shape[0], OUTW - F - C), jnp.float32)
    return jnp.concatenate([hidden, scores, pad], axis=-1)


# ----------------------------------------------------------------------------
# Single-step kernel (exactly the module's forward; parity-test path)
# ----------------------------------------------------------------------------
def forward_unit_kernel(img_ref, wordf_ref, lasth_ref,
                        wl_ref, sht_ref, w1i_ref, w1t_ref, w1h_ref, b1_ref,
                        w2_ref, b2_ref, w3_ref, b3_ref, out_ref):
    f32 = jnp.float32
    tca = _tca_batched(wordf_ref[...], wl_ref[...], sht_ref[...], B)  # (B, DW)
    # split linear1: img + tca + h contributions, no concat / no zero padding
    pre = (jnp.dot(img_ref[...], w1i_ref[...], preferred_element_type=f32)
           + b1_ref[...]
           + jnp.dot(tca, w1t_ref[...], preferred_element_type=f32)
           + jnp.dot(lasth_ref[...], w1h_ref[...], preferred_element_type=f32))
    hidden, scores = _mlp_tail(pre, w2_ref[...], b2_ref[...],
                               w3_ref[...], b3_ref[...])
    out_ref[...] = _pack_rows(hidden, scores)   # one unmasked 128-lane store


def forward_unit(image_x, word_x, last_h, kp, local_scores_list):
    """Pallas-backed ForwardUnit.forward.  Returns (image_x, word_x, hidden, list).

    Kept for single-step parity testing; hot multi-step loops should use
    forward_unit_sequence (one pallas_call per sequence, not per step).
    """
    wordf = word_x.reshape(B * S, DW)                 # host-side flatten
    ins = (image_x, wordf, last_h,
           kp['wl_t'], kp['sh_t'], kp['w1_img_t'], kp['w1_tca_t'],
           kp['w1_h_t'], kp['b1'], kp['w2_t'], kp['b2'], kp['w3_t'], kp['b3'])
    packed = pl.pallas_call(
        forward_unit_kernel,
        out_shape=jax.ShapeDtypeStruct((B, OUTW), jnp.float32),
        in_specs=[_vmem() for _ in ins],
        out_specs=_vmem(),
    )(*ins)
    hidden_out = packed[:, :F]
    local_scores = packed[:, F:F + C]
    # Python-list mutation from the original module stays host-side glue.
    new_list = list(local_scores_list) + [local_scores]
    return image_x, word_x, hidden_out, new_list


# ----------------------------------------------------------------------------
# Fused T-step sequence kernel: ONE pallas_call, no grid, fully unrolled loop.
# TCA (carry-independent) is batched over all T steps; only the tiny MLP head
# sits on the serial hidden-state chain.
# ----------------------------------------------------------------------------
def _make_seq_kernel(t_steps):
    def kernel(img_ref, wordf_ref, h0_ref,
               wl_ref, sht_ref, w1i_ref, w1t_ref, w1h_ref, b1_ref,
               w2_ref, b2_ref, w3_ref, b3_ref, out_ref, tca_c_scr):
        f32 = jnp.float32

        # --- carry-independent work, batched over all T*B rows -------------
        tca_all = _tca_batched(wordf_ref[...], wl_ref[...], sht_ref[...],
                               t_steps * B)                        # (T*B, DW)
        # pre-batch the linear1 tca-contribution for every timestep too
        tca_c_scr[...] = jnp.dot(tca_all, w1t_ref[...],
                                 preferred_element_type=f32)       # (T*B, F)
        # time-invariant image contribution of linear1 (+ bias), once
        img_contrib = (jnp.dot(img_ref[...], w1i_ref[...],
                               preferred_element_type=f32) + b1_ref[...])

        w1h = w1h_ref[...]
        w2, b2 = w2_ref[...], b2_ref[...]
        w3, b3 = w3_ref[...], b3_ref[...]

        # --- serial carry chain: fully unrolled static timestep loop -------
        h = h0_ref[...]
        for t in range(t_steps):
            tca_c = tca_c_scr[pl.ds(t * B, B), :]                  # (B, F)
            pre = (img_contrib + tca_c
                   + jnp.dot(h, w1h, preferred_element_type=f32))
            hidden, scores = _mlp_tail(pre, w2, b2, w3, b3)
            # one full-width lane-dense (B, 128) store per step
            out_ref[pl.ds(t * B, B), :] = _pack_rows(hidden, scores)
            h = hidden                                             # carry (DH == F)
    return kernel


def forward_unit_sequence(image_x, word_seq, h0, kp):
    """Run T chained applications of the same ForwardUnit in one pallas_call."""
    assert DH == F, "hidden carry requires hidden_dim == feature_out_dim"
    t_steps = word_seq.shape[0]
    wordf = word_seq.reshape(t_steps * B * S, DW)      # host-side flatten
    ins = (image_x, wordf, h0,
           kp['wl_t'], kp['sh_t'], kp['w1_img_t'], kp['w1_tca_t'],
           kp['w1_h_t'], kp['b1'], kp['w2_t'], kp['b2'], kp['w3_t'], kp['b3'])
    packed = pl.pallas_call(
        _make_seq_kernel(t_steps),
        out_shape=jax.ShapeDtypeStruct((t_steps * B, OUTW), jnp.float32),
        in_specs=[_vmem() for _ in ins],
        out_specs=_vmem(),
        scratch_shapes=[pltpu.VMEM((t_steps * B, F), jnp.float32)],
    )(*ins)
    packed = packed.reshape(t_steps, B, OUTW)
    hidden_seq = packed[:, :, :F]
    scores_seq = packed[:, :, F:F + C]
    return hidden_seq, scores_seq


# ---------------- pure-JAX reference (mirrors the PyTorch ops) ----------------
def forward_unit_ref(image_x, word_x, last_h, p):
    oh = jnp.tanh(word_x @ p['wl_t'])                          # (B, S, DL)
    attn = jnp.einsum('cl,bsl->bcs', p['s_h'], oh)             # (B, C, S)
    w = jax.nn.softmax(attn, axis=-1)
    att_out = jnp.einsum('bcs,bsw->bcw', w, word_x)            # (B, C, DW)
    tca = jnp.mean(att_out, axis=1)                            # (B, DW)
    unit_in = jnp.concatenate([image_x, tca, last_h], axis=-1)
    w1 = jnp.concatenate([p['w1_img_t'], p['w1_tca_t'], p['w1_h_t']], axis=0)
    hidden = jax.nn.relu(unit_in @ w1 + p['b1'])
    feat = jax.nn.relu(hidden @ p['w2_t'] + p['b2'])
    scores = jax.nn.sigmoid(feat @ p['w3_t'] + p['b3'])
    return hidden, scores


def make_params(key):
    ks = jax.random.split(key, 9)
    K1 = DI + DW + DH

    def init(k, shape, fan_in):
        return (jax.random.normal(k, shape) / jnp.sqrt(float(fan_in))).astype(jnp.float32)

    return {
        'wl_t': init(ks[0], (DW, DL), DW),                # linear_label, (in, out)
        's_h': init(ks[1], (C, DL), DL),                  # S_h parameter
        'w1_img_t': init(ks[2], (DI, F), K1),
        'w1_tca_t': init(ks[3], (DW, F), K1),
        'w1_h_t': init(ks[4], (DH, F), K1),
        'b1': jnp.zeros((1, F), jnp.float32),
        'w2_t': init(ks[5], (F, F), F),
        'b2': (0.01 * jax.random.normal(ks[6], (1, F))).astype(jnp.float32),
        'w3_t': init(ks[7], (F, C), F),
        'b3': (0.01 * jax.random.normal(ks[8], (1, C))).astype(jnp.float32),
    }


def prepare_kernel_params(p):
    """Host-side layout prep: pre-transpose S_h; keep linear1 split (no pad)."""
    return {
        'wl_t': p['wl_t'],
        'sh_t': jnp.transpose(p['s_h']),                  # (DL, C)
        'w1_img_t': p['w1_img_t'],
        'w1_tca_t': p['w1_tca_t'],
        'w1_h_t': p['w1_h_t'],
        'b1': p['b1'], 'w2_t': p['w2_t'], 'b2': p['b2'],
        'w3_t': p['w3_t'], 'b3': p['b3'],
    }


if __name__ == "__main__":
    key = jax.random.PRNGKey(0)
    k_img, k_word, k_h, k_params, k_seq = jax.random.split(key, 5)

    image_x = jax.random.normal(k_img, (B, DI), dtype=jnp.float32)
    word_x = jax.random.normal(k_word, (B, S, DW), dtype=jnp.float32)
    last_h = jax.random.normal(k_h, (B, DH), dtype=jnp.float32)
    params = make_params(k_params)
    kparams = prepare_kernel_params(params)

    # ---- single-step (exact module semantics, parity path) ----
    img_out, word_out, hidden_out, scores_list = forward_unit(
        image_x, word_x, last_h, kparams, [])
    jax.block_until_ready(hidden_out)
    jax.block_until_ready(scores_list[-1])

    hidden_ref, scores_ref = forward_unit_ref(image_x, word_x, last_h, params)
    assert hidden_out.shape == (B, F)
    assert scores_list[-1].shape == (B, C)
    # Tolerance 5e-3: the in-kernel softmax uses the approximate EUP reciprocal
    # (pl.reciprocal(..., approx=True)); fine for inference.
    assert jnp.allclose(hidden_out, hidden_ref, atol=5e-3, rtol=5e-3)
    assert jnp.allclose(scores_list[-1], scores_ref, atol=5e-3, rtol=5e-3)
    assert jnp.array_equal(img_out, image_x) and jnp.array_equal(word_out, word_x)

    # ---- fused T-step sequence (single pallas_call, TCA hoisted & batched) ----
    word_seq = jax.random.normal(k_seq, (T, B, S, DW), dtype=jnp.float32)
    hidden_seq, scores_seq = forward_unit_sequence(image_x, word_seq, last_h, kparams)
    jax.block_until_ready(scores_seq)

    h = last_h
    for t in range(T):
        h_ref_t, s_ref_t = forward_unit_ref(image_x, word_seq[t], h, params)
        assert jnp.allclose(hidden_seq[t], h_ref_t, atol=1e-2, rtol=1e-2)
        assert jnp.allclose(scores_seq[t], s_ref_t, atol=1e-2, rtol=1e-2)
        h = h_ref_t

    print("KERNEL_OK")
</pallas_src>

<mosaic_0001>
module attributes {stable_mosaic.version = 11 : i64} {
  func.func @forward_unit_kernel(%arg0: memref<2x32xf32, #tpu.memory_space<vmem>>, %arg1: memref<16x32xf32, #tpu.memory_space<vmem>>, %arg2: memref<2x32xf32, #tpu.memory_space<vmem>>, %arg3: memref<32x16xf32, #tpu.memory_space<vmem>>, %arg4: memref<16x8xf32, #tpu.memory_space<vmem>>, %arg5: memref<32x32xf32, #tpu.memory_space<vmem>>, %arg6: memref<32x32xf32, #tpu.memory_space<vmem>>, %arg7: memref<32x32xf32, #tpu.memory_space<vmem>>, %arg8: memref<1x32xf32, #tpu.memory_space<vmem>>, %arg9: memref<32x32xf32, #tpu.memory_space<vmem>>, %arg10: memref<1x32xf32, #tpu.memory_space<vmem>>, %arg11: memref<32x8xf32, #tpu.memory_space<vmem>>, %arg12: memref<1x8xf32, #tpu.memory_space<vmem>>, %arg13: memref<2x128xf32, #tpu.memory_space<vmem>>) attributes {dimension_semantics = [], scalar_prefetch = 0 : i64, scratch_operands = 0 : i64, tpu.core_type = #tpu.core_type<tc>} {
    %c0 = arith.constant 0 : index
    %c0_0 = arith.constant 0 : index
    %0 = vector.load %arg1[%c0, %c0_0] : memref<16x32xf32, #tpu.memory_space<vmem>>, vector<16x32xf32>
    %c0_1 = arith.constant 0 : index
    %c0_2 = arith.constant 0 : index
    %1 = vector.load %arg3[%c0_1, %c0_2] : memref<32x16xf32, #tpu.memory_space<vmem>>, vector<32x16xf32>
    %c0_3 = arith.constant 0 : index
    %c0_4 = arith.constant 0 : index
    %2 = vector.load %arg4[%c0_3, %c0_4] : memref<16x8xf32, #tpu.memory_space<vmem>>, vector<16x8xf32>
    %cst = arith.constant dense<0.000000e+00> : vector<16x16xf32>
    %3 = tpu.matmul %0, %1, %cst {dimension_numbers = #tpu.dot_dimension_numbers<[1], [0], [0], [1], [0, 0, 1, 1], [], []>} : vector<16x32xf32>, vector<32x16xf32>, vector<16x16xf32> -> vector<16x16xf32>
    %4 = math.tanh %3 : vector<16x16xf32>
    %cst_5 = arith.constant dense<0.000000e+00> : vector<16x8xf32>
    %5 = tpu.matmul %4, %2, %cst_5 {dimension_numbers = #tpu.dot_dimension_numbers<[1], [0], [0], [1], [0, 0, 1, 1], [], []>} : vector<16x16xf32>, vector<16x8xf32>, vector<16x8xf32> -> vector<16x8xf32>
    %6 = math.exp %5 : vector<16x8xf32>
    %7 = vector.shape_cast %6 : vector<16x8xf32> to vector<2x8x8xf32>
    %cst_6 = arith.constant dense<0.000000e+00> : vector<2x8xf32>
    %8 = vector.multi_reduction <add>, %7, %cst_6 [1] : vector<2x8x8xf32> to vector<2x8xf32>
    %9 = vector.shape_cast %8 : vector<2x8xf32> to vector<2x1x8xf32>
    %10 = tpu.reciprocal %9 {approx = true} : vector<2x1x8xf32> -> vector<2x1x8xf32>
    %11 = vector.broadcast %10 : vector<2x1x8xf32> to vector<2x8x8xf32>
    %12 = arith.mulf %7, %11 : vector<2x8x8xf32>
    %cst_7 = arith.constant dense<0.000000e+00> : vector<2x8xf32>
    %13 = vector.multi_reduction <add>, %12, %cst_7 [2] : vector<2x8x8xf32> to vector<2x8xf32>
    %14 = vector.shape_cast %13 : vector<2x8xf32> to vector<2x8x1xf32>
    %cst_8 = arith.constant 1.250000e-01 : f32
    %15 = vector.broadcast %cst_8 : f32 to vector<2x8x1xf32>
    %16 = arith.mulf %14, %15 : vector<2x8x1xf32>
    %17 = vector.shape_cast %0 : vector<16x32xf32> to vector<2x8x32xf32>
    %18 = vector.broadcast %16 : vector<2x8x1xf32> to vector<2x8x32xf32>
    %19 = arith.mulf %18, %17 : vector<2x8x32xf32>
    %cst_9 = arith.constant dense<0.000000e+00> : vector<2x32xf32>
    %20 = vector.multi_reduction <add>, %19, %cst_9 [1] : vector<2x8x32xf32> to vector<2x32xf32>
    %c0_10 = arith.constant 0 : index
    %c0_11 = arith.constant 0 : index
    %21 = vector.load %arg0[%c0_10, %c0_11] : memref<2x32xf32, #tpu.memory_space<vmem>>, vector<2x32xf32>
    %c0_12 = arith.constant 0 : index
    %c0_13 = arith.constant 0 : index
    %22 = vector.load %arg5[%c0_12, %c0_13] : memref<32x32xf32, #tpu.memory_space<vmem>>, vector<32x32xf32>
    %cst_14 = arith.constant dense<0.000000e+00> : vector<2x32xf32>
    %23 = tpu.matmul %21, %22, %cst_14 {dimension_numbers = #tpu.dot_dimension_numbers<[1], [0], [0], [1], [0, 0, 1, 1], [], []>} : vector<2x32xf32>, vector<32x32xf32>, vector<2x32xf32> -> vector<2x32xf32>
    %c0_15 = arith.constant 0 : index
    %c0_16 = arith.constant 0 : index
    %24 = vector.load %arg8[%c0_15, %c0_16] : memref<1x32xf32, #tpu.memory_space<vmem>>, vector<1x32xf32>
    %25 = vector.broadcast %24 : vector<1x32xf32> to vector<2x32xf32>
    %26 = arith.addf %23, %25 : vector<2x32xf32>
    %c0_17 = arith.constant 0 : index
    %c0_18 = arith.constant 0 : index
    %27 = vector.load %arg6[%c0_17, %c0_18] : memref<32x32xf32, #tpu.memory_space<vmem>>, vector<32x32xf32>
    %cst_19 = arith.constant dense<0.000000e+00> : vector<2x32xf32>
    %28 = tpu.matmul %20, %27, %cst_19 {dimension_numbers = #tpu.dot_dimension_numbers<[1], [0], [0], [1], [0, 0, 1, 1], [], []>} : vector<2x32xf32>, vector<32x32xf32>, vector<2x32xf32> -> vector<2x32xf32>
    %29 = arith.addf %26, %28 : vector<2x32xf32>
    %c0_20 = arith.constant 0 : index
    %c0_21 = arith.constant 0 : index
    %30 = vector.load %arg2[%c0_20, %c0_21] : memref<2x32xf32, #tpu.memory_space<vmem>>, vector<2x32xf32>
    %c0_22 = arith.constant 0 : index
    %c0_23 = arith.constant 0 : index
    %31 = vector.load %arg7[%c0_22, %c0_23] : memref<32x32xf32, #tpu.memory_space<vmem>>, vector<32x32xf32>
    %cst_24 = arith.constant dense<0.000000e+00> : vector<2x32xf32>
    %32 = tpu.matmul %30, %31, %cst_24 {dimension_numbers = #tpu.dot_dimension_numbers<[1], [0], [0], [1], [0, 0, 1, 1], [], []>} : vector<2x32xf32>, vector<32x32xf32>, vector<2x32xf32> -> vector<2x32xf32>
    %33 = arith.addf %29, %32 : vector<2x32xf32>
    %c0_25 = arith.constant 0 : index
    %c0_26 = arith.constant 0 : index
    %34 = vector.load %arg9[%c0_25, %c0_26] : memref<32x32xf32, #tpu.memory_space<vmem>>, vector<32x32xf32>
    %c0_27 = arith.constant 0 : index
    %c0_28 = arith.constant 0 : index
    %35 = vector.load %arg10[%c0_27, %c0_28] : memref<1x32xf32, #tpu.memory_space<vmem>>, vector<1x32xf32>
    %c0_29 = arith.constant 0 : index
    %c0_30 = arith.constant 0 : index
    %36 = vector.load %arg11[%c0_29, %c0_30] : memref<32x8xf32, #tpu.memory_space<vmem>>, vector<32x8xf32>
    %c0_31 = arith.constant 0 : index
    %c0_32 = arith.constant 0 : index
    %37 = vector.load %arg12[%c0_31, %c0_32] : memref<1x8xf32, #tpu.memory_space<vmem>>, vector<1x8xf32>
    %cst_33 = arith.constant 0.000000e+00 : f32
    %38 = vector.broadcast %cst_33 : f32 to vector<2x32xf32>
    %39 = arith.maximumf %33, %38 : vector<2x32xf32>
    %cst_34 = arith.constant dense<0.000000e+00> : vector<2x32xf32>
    %40 = tpu.matmul %39, %34, %cst_34 {dimension_numbers = #tpu.dot_dimension_numbers<[1], [0], [0], [1], [0, 0, 1, 1], [], []>} : vector<2x32xf32>, vector<32x32xf32>, vector<2x32xf32> -> vector<2x32xf32>
    %41 = vector.broadcast %35 : vector<1x32xf32> to vector<2x32xf32>
    %42 = arith.addf %40, %41 : vector<2x32xf32>
    %cst_35 = arith.constant 0.000000e+00 : f32
    %43 = vector.broadcast %cst_35 : f32 to vector<2x32xf32>
    %44 = arith.maximumf %42, %43 : vector<2x32xf32>
    %cst_36 = arith.constant dense<0.000000e+00> : vector<2x8xf32>
    %45 = tpu.matmul %44, %36, %cst_36 {dimension_numbers = #tpu.dot_dimension_numbers<[1], [0], [0], [1], [0, 0, 1, 1], [], []>} : vector<2x32xf32>, vector<32x8xf32>, vector<2x8xf32> -> vector<2x8xf32>
    %46 = vector.broadcast %37 : vector<1x8xf32> to vector<2x8xf32>
    %47 = arith.addf %45, %46 : vector<2x8xf32>
    %48 = arith.negf %47 : vector<2x8xf32>
    %49 = math.exp %48 : vector<2x8xf32>
    %cst_37 = arith.constant 1.000000e+00 : f32
    %50 = vector.broadcast %cst_37 : f32 to vector<2x8xf32>
    %51 = arith.addf %50, %49 : vector<2x8xf32>
    %52 = arith.divf %50, %51 : vector<2x8xf32>
    %cst_38 = arith.constant 0.000000e+00 : f32
    %53 = vector.broadcast %cst_38 : f32 to vector<2x88xf32>
    %54 = tpu.concatenate %39, %52, %53 in 1 : vector<2x32xf32>, vector<2x8xf32>, vector<2x88xf32> -> vector<2x128xf32>
    %c0_39 = arith.constant 0 : index
    %c0_40 = arith.constant 0 : index
    %55 = vector.load %arg13[%c0_39, %c0_40] : memref<2x128xf32, #tpu.memory_space<vmem>>, vector<2x128xf32>
    tpu.vector_store %arg13[%c0_39, %c0_40], %54 {strides = array<i32>} : memref<2x128xf32, #tpu.memory_space<vmem>>, vector<2x128xf32>,
    return
  }
}

</mosaic_0001>

<llo_original>
// kernel: tpu_custom_call.1
$region0: #{tpu_custom_call.1}
  #allocation0 [shape = 'u32[]', space=smem, size = 0x4, offset = 0x4, fixed_abs, tag = 'smem constant byte address 0x4 - core index']
  #allocation1 [shape = 'u32[144,128]{1,0:T(1,128)}', space=vmem, size = 0x12000, scoped, tag = 'internal scratch']
  %s0 = inlined_call_operand.vmem [shape: f32[2,32], index: 0, kind: input, shape index: {}]
  %s1 = inlined_call_operand.hbm [shape: f32[16,32], index: 1, kind: input, shape index: {}]
  %s2 = inlined_call_operand.hbm [shape: f32[2,32], index: 2, kind: input, shape index: {}]
  %s3 = inlined_call_operand.vmem [shape: f32[32,16], index: 3, kind: input, shape index: {}]
  %s4 = inlined_call_operand.vmem [shape: f32[16,8], index: 4, kind: input, shape index: {}]
  %s5 = inlined_call_operand.vmem [shape: f32[32,32], index: 5, kind: input, shape index: {}]
  %s6 = inlined_call_operand.vmem [shape: f32[32,32], index: 6, kind: input, shape index: {}]
  %s7 = inlined_call_operand.vmem [shape: f32[32,32], index: 7, kind: input, shape index: {}]
  %s8 = inlined_call_operand.vmem [shape: f32[1,32], index: 8, kind: input, shape index: {}]
  %s9 = inlined_call_operand.vmem [shape: f32[32,32], index: 9, kind: input, shape index: {}]
  %s10 = inlined_call_operand.vmem [shape: f32[1,32], index: 10, kind: input, shape index: {}]
  %s11 = inlined_call_operand.vmem [shape: f32[32,8], index: 11, kind: input, shape index: {}]
  %s12 = inlined_call_operand.vmem [shape: f32[1,8], index: 12, kind: input, shape index: {}]
  %s13 = inlined_call_operand.hbm [shape: f32[2,128], index: 13, kind: output, shape index: {}]
  %s14 = sld [smem:[#allocation0]]
  $region70: #{tpu_custom_call.1} parent=0
    _
  %s16 = ssub.s32 1, %s14
  %s17 = scalar_select 0, %s16, %s14
  $region1: #{tpu_custom_call.1} parent=0
    #allocation2 [shape = 'u8[8192]{0}', space=vmem, size = 0x2000, scoped, tag = 'input window, operand 1, single buffered']
    #allocation3 [shape = 's32[1]{0}', space=sflag, size = 0x4, scoped, tag = 'scoped memory for tpu_custom_call.1']
    #allocation4 [shape = 's32[1]{0}', space=sflag, size = 0x4, scoped, tag = 'scoped memory for tpu_custom_call.1']
    #allocation5 [shape = 'u8[1024]{0}', space=vmem, size = 0x400, scoped, tag = 'input window, operand 2, single buffered']
    #allocation6 [shape = 's32[1]{0}', space=sflag, size = 0x4, scoped, tag = 'scoped memory for tpu_custom_call.1']
    #allocation7 [shape = 'u8[1024]{0}', space=vmem, size = 0x400, scoped, tag = 'output window, operand 0, single buffered']
    %18 = vsyncpa [#allocation3], 0
    %19 = vsyncpa [#allocation6], 0
    %20 = vsyncpa [#allocation4], 0
    // Predicated region
    $region2: #{tpu_custom_call.1} parent=1 // pred_check
      _
    $region3: #{tpu_custom_call.1} parent=1 // pred_check_branch
      %22 = sbr.rel (0) target = $region5
    $region4: #{tpu_custom_call.1} parent=1 // pred_region
      _
    $region5: #{tpu_custom_call.1} parent=1 // pred_fallthru
      _
    // Predicated region
    $region6: #{tpu_custom_call.1} parent=1 // pred_check
      _
    $region7: #{tpu_custom_call.1} parent=1 // pred_check_branch
      %24 = sbr.rel (0) target = $region9
    $region8: #{tpu_custom_call.1} parent=1 // pred_region
      %s26 = ssub.s32 256, 256
      %27 = vsyncadd [#allocation3], %s26
      %s28 = sshll.u32 [#allocation2], 4
      %s29 = int_to_ptr.vmem [resolvable:$true] %s28
      %34 = dma.hbm_to_vmem [thread:$0]  %s1, 256, %s29, [#allocation3], 128, 128, 8
    $region9: #{tpu_custom_call.1} parent=1 // pred_fallthru
      _
    // Predicated region
    $region10: #{tpu_custom_call.1} parent=1 // pred_check
      _
    $region11: #{tpu_custom_call.1} parent=1 // pred_check_branch
      %36 = sbr.rel (0) target = $region13
    $region12: #{tpu_custom_call.1} parent=1 // pred_region
      %s38 = ssub.s32 32, 32
      %39 = vsyncadd [#allocation6], %s38
      %s41 = sshll.u32 [#allocation5], 4
      %s42 = int_to_ptr.vmem [resolvable:$true] %s41
      %44 = dma.hbm_to_vmem [thread:$0]  %s2, 32, %s42, [#allocation6]
    $region13: #{tpu_custom_call.1} parent=1 // pred_fallthru
      _
    // Predicated region
    $region14: #{tpu_custom_call.1} parent=1 // pred_check
      _
    $region15: #{tpu_custom_call.1} parent=1 // pred_check_branch
      %46 = sbr.rel (0) target = $region17
    $region16: #{tpu_custom_call.1} parent=1 // pred_region
      _
    $region17: #{tpu_custom_call.1} parent=1 // pred_fallthru
      _
    // Predicated region
    $region18: #{tpu_custom_call.1} parent=1 // pred_check
      _
    $region19: #{tpu_custom_call.1} parent=1 // pred_check_branch
      %48 = sbr.rel (0) target = $region21
    $region20: #{tpu_custom_call.1} parent=1 // pred_region
      _
    $region21: #{tpu_custom_call.1} parent=1 // pred_fallthru
      _
    // Predicated region
    $region22: #{tpu_custom_call.1} parent=1 // pred_check
      _
    $region23: #{tpu_custom_call.1} parent=1 // pred_check_branch
      %50 = sbr.rel (0) target = $region25
    $region24: #{tpu_custom_call.1} parent=1 // pred_region
      _
    $region25: #{tpu_custom_call.1} parent=1 // pred_fallthru
      _
    // Predicated region
    $region26: #{tpu_custom_call.1} parent=1 // pred_check
      _
    $region27: #{tpu_custom_call.1} parent=1 // pred_check_branch
      %52 = sbr.rel (0) target = $region29
    $region28: #{tpu_custom_call.1} parent=1 // pred_region
      _
    $region29: #{tpu_custom_call.1} parent=1 // pred_fallthru
      _
    // Predicated region
    $region30: #{tpu_custom_call.1} parent=1 // pred_check
      _
    $region31: #{tpu_custom_call.1} parent=1 // pred_check_branch
      %54 = sbr.rel (0) target = $region33
    $region32: #{tpu_custom_call.1} parent=1 // pred_region
      _
    $region33: #{tpu_custom_call.1} parent=1 // pred_fallthru
      _
    // Predicated region
    $region34: #{tpu_custom_call.1} parent=1 // pred_check
      _
    $region35: #{tpu_custom_call.1} parent=1 // pred_check_branch
      %56 = sbr.rel (0) target = $region37
    $region36: #{tpu_custom_call.1} parent=1 // pred_region
      _
    $region37: #{tpu_custom_call.1} parent=1 // pred_fallthru
      _
    // Predicated region
    $region38: #{tpu_custom_call.1} parent=1 // pred_check
      _
    $region39: #{tpu_custom_call.1} parent=1 // pred_check_branch
      %58 = sbr.rel (0) target = $region41
    $region40: #{tpu_custom_call.1} parent=1 // pred_region
      _
    $region41: #{tpu_custom_call.1} parent=1 // pred_fallthru
      _
    // Predicated region
    $region42: #{tpu_custom_call.1} parent=1 // pred_check
      _
    $region43: #{tpu_custom_call.1} parent=1 // pred_check_branch
      %60 = sbr.rel (0) target = $region45
    $region44: #{tpu_custom_call.1} parent=1 // pred_region
      _
    $region45: #{tpu_custom_call.1} parent=1 // pred_fallthru
      _
    // Predicated region
    $region46: #{tpu_custom_call.1} parent=1 // pred_check
      _
    $region47: #{tpu_custom_call.1} parent=1 // pred_check_branch
      %62 = sbr.rel (0) target = $region49
    $region48: #{tpu_custom_call.1} parent=1 // pred_region
      _
    $region49: #{tpu_custom_call.1} parent=1 // pred_fallthru
      _
    // Predicated region
    $region50: #{tpu_custom_call.1} parent=1 // pred_check
      _
    $region51: #{tpu_custom_call.1} parent=1 // pred_check_branch
      %64 = sbr.rel (0) target = $region53
    $region52: #{tpu_custom_call.1} parent=1 // pred_region
      _
    $region53: #{tpu_custom_call.1} parent=1 // pred_fallthru
      _
    // Predicated region
    $region54: #{tpu_custom_call.1} parent=1 // pred_check
      _
    $region55: #{tpu_custom_call.1} parent=1 // pred_check_branch
      %66 = sbr.rel (0) target = $region57
    $region56: #{tpu_custom_call.1} parent=1 // pred_region
      %67 = dma.done [#allocation3], 256
    $region57: #{tpu_custom_call.1} parent=1 // pred_fallthru
      _
    // Predicated region
    $region58: #{tpu_custom_call.1} parent=1 // pred_check
      _
    $region59: #{tpu_custom_call.1} parent=1 // pred_check_branch
      %69 = sbr.rel (0) target = $region61
    $region60: #{tpu_custom_call.1} parent=1 // pred_region
      %70 = dma.done [#allocation6], 32
    $region61: #{tpu_custom_call.1} parent=1 // pred_fallthru
      _
    %v71 = vld [vmem:[#allocation2] sm:$0xff]
    %v72 = vld [vmem:[#allocation2 + $0x8] sm:$0xff]
    %v73 = vld [vmem:[%s3] sm:$0xff]
    %v74 = vld [vmem:[%s3 + $0x8] sm:$0xff]
    %v75 = vld [vmem:[%s3 + $0x10] sm:$0xff]
    %v76 = vld [vmem:[%s3 + $0x18] sm:$0xff]
    %v77 = vld [vmem:[%s4] sm:$0xff]
    %v78 = vld [vmem:[%s4 + $0x8] sm:$0xff]
    %vm79 = vcmask 261120
    %v81 = vsel %vm79, %v71, 0
    %v84 = vsel %vm79, %v72, 0
    %86 = vmatprep.subr.mxu0 0.0
    %87 = vmatpush1.msra.mxu0 %v73
    %88 = vmatprep.subr.mxu0 0.0
    %89 = vmatpush1.msra.mxu0 %v74
    %90 = vmatprep.subr.mxu0 0.0
    %91 = vmatpush1.msra.mxu0 %v75
    %92 = vmatprep.subr.mxu0 0.0
    %93 = vmatpush1.msra.mxu0 %v76
    %94 = vmatprep.subr.mxu0 0.0
    %95 = vmatpush1.msra.mxu0 0.0
    %96 = vmatprep.subr.mxu0 0.0
    %97 = vmatpush1.msra.mxu0 0.0
    %98 = vmatprep.subr.mxu0 0.0
    %99 = vmatpush1.msra.mxu0 0.0
    %100 = vmatprep.subr.mxu0 0.0
    %101 = vmatpush1.msra.mxu0 0.0
    %102 = vmatprep.subr.mxu0 0.0
    %103 = vmatpush1.msra.mxu0 0.0
    %104 = vmatprep.subr.mxu0 0.0
    %105 = vmatpush1.msra.mxu0 0.0
    %106 = vmatprep.subr.mxu0 0.0
    %107 = vmatpush1.msra.mxu0 0.0
    %108 = vmatprep.subr.mxu0 0.0
    %109 = vmatpush1.msra.mxu0 0.0
    %110 = vmatprep.subr.mxu0 0.0
    %111 = vmatpush1.msra.mxu0 0.0
    %112 = vmatprep.subr.mxu0 0.0
    %113 = vmatpush1.msra.mxu0 0.0
    %114 = vmatprep.subr.mxu0 0.0
    %115 = vmatpush1.msra.mxu0 0.0
    %116 = vmatprep.subr.mxu0 0.0
    %117 = vmatpush1.msra.mxu0 0.0
    %118 = vmatprep.subr.mxu0 0.0
    %119 = vmatpush1.msra.mxu0 0.0
    %120 = vmatprep.subr.mxu0 0.0
    %121 = vmatpush1.msra.mxu0 0.0
    %122 = vmatprep.subr.mxu0 0.0
    %123 = vmatpush1.msra.mxu0 0.0
    %124 = vmatprep.subr.mxu0 0.0
    %125 = vmatpush1.msra.mxu0 0.0
    %126 = vmatprep.subr.mxu0 0.0
    %127 = vmatpush1.msra.mxu0 0.0
    %128 = vmatprep.subr.mxu0 0.0
    %129 = vmatpush1.msra.mxu0 0.0
    %130 = vmatprep.subr.mxu0 0.0
    %131 = vmatpush1.msra.mxu0 0.0
    %132 = vmatprep.subr.mxu0 0.0
    %133 = vmatpush1.msra.mxu0 0.0
    %134 = vmatprep.subr.mxu0 0.0
    %135 = vmatpush1.msra.mxu0 0.0
    %136 = vmatprep.subr.mxu0 0.0
    %137 = vmatpush1.msra.mxu0 0.0
    %138 = vmatprep.subr.mxu0 0.0
    %139 = vmatpush1.msra.mxu0 0.0
    %140 = vmatprep.subr.mxu0 0.0
    %141 = vmatpush1.msra.mxu0 0.0
    %142 = vmatprep.subr.mxu0 0.0
    %143 = vmatpush1.msra.mxu0 0.0
    %144 = vmatprep.subr.mxu0 0.0
    %145 = vmatpush1.msra.mxu0 0.0
    %146 = vmatprep.subr.mxu0 0.0
    %147 = vmatpush1.msra.mxu0 0.0
    %148 = vmatprep.subr.mxu0 0.0
    %149 = vmatpush1.msra.mxu0 0.0
    %150 = vmatprep.mubr.f32.mxu0 0.0
    %151 = vmatmul.mubr.f32.gmra.mrb[0].mxu0 %v81
    %v152 = vpop.f32.mrb[0].mxu0
    %v153 = vadd.f32 0.0, %v152
    %v154 = vpop.f32.mrb[0].mxu0
    %155 = vmatprep.mubr.f32.mxu0 0.0
    %156 = vmatmul.mubr.f32.gmra.mrb[0].mxu0 %v84
    %v157 = vpop.f32.mrb[0].mxu0
    %v158 = vadd.f32 0.0, %v157
    %v159 = vpop.f32.mrb[0].mxu0
    %160 = vdwg.mxu0
    %v161 = vtanh.pop %v153
    %v162 = vtanh.pop %v158
    %vm163 = vcmask 130048
    %v165 = vsel %vm163, %v161, 0
    %v168 = vsel %vm163, %v162, 0
    %170 = vmatprep.subr.mxu0 0.0
    %171 = vmatpush1.msra.mxu0 %v77
    %172 = vmatprep.subr.mxu0 0.0
    %173 = vmatpush1.msra.mxu0 %v78
    %174 = vmatprep.subr.mxu0 0.0
    %175 = vmatpush1.msra.mxu0 0.0
    %176 = vmatprep.subr.mxu0 0.0
    %177 = vmatpush1.msra.mxu0 0.0
    %178 = vmatprep.subr.mxu0 0.0
    %179 = vmatpush1.msra.mxu0 0.0
    %180 = vmatprep.subr.mxu0 0.0
    %181 = vmatpush1.msra.mxu0 0.0
    %182 = vmatprep.subr.mxu0 0.0
    %183 = vmatpush1.msra.mxu0 0.0
    %184 = vmatprep.subr.mxu0 0.0
    %185 = vmatpush1.msra.mxu0 0.0
    %186 = vmatprep.subr.mxu0 0.0
    %187 = vmatpush1.msra.mxu0 0.0
    %188 = vmatprep.subr.mxu0 0.0
    %189 = vmatpush1.msra.mxu0 0.0
    %190 = vmatprep.subr.mxu0 0.0
    %191 = vmatpush1.msra.mxu0 0.0
    %192 = vmatprep.subr.mxu0 0.0
    %193 = vmatpush1.msra.mxu0 0.0
    %194 = vmatprep.subr.mxu0 0.0
    %195 = vmatpush1.msra.mxu0 0.0
    %196 = vmatprep.subr.mxu0 0.0
    %197 = vmatpush1.msra.mxu0 0.0
    %198 = vmatprep.subr.mxu0 0.0
    %199 = vmatpush1.msra.mxu0 0.0
    %200 = vmatprep.subr.mxu0 0.0
    %201 = vmatpush1.msra.mxu0 0.0
    %202 = vmatprep.subr.mxu0 0.0
    %203 = vmatpush1.msra.mxu0 0.0
    %204 = vmatprep.subr.mxu0 0.0
    %205 = vmatpush1.msra.mxu0 0.0
    %206 = vmatprep.subr.mxu0 0.0
    %207 = vmatpush1.msra.mxu0 0.0
    %208 = vmatprep.subr.mxu0 0.0
    %209 = vmatpush1.msra.mxu0 0.0
    %210 = vmatprep.subr.mxu0 0.0
    %211 = vmatpush1.msra.mxu0 0.0
    %212 = vmatprep.subr.mxu0 0.0
    %213 = vmatpush1.msra.mxu0 0.0
    %214 = vmatprep.subr.mxu0 0.0
    %215 = vmatpush1.msra.mxu0 0.0
    %216 = vmatprep.subr.mxu0 0.0
    %217 = vmatpush1.msra.mxu0 0.0
    %218 = vmatprep.subr.mxu0 0.0
    %219 = vmatpush1.msra.mxu0 0.0
    %220 = vmatprep.subr.mxu0 0.0
    %221 = vmatpush1.msra.mxu0 0.0
    %222 = vmatprep.subr.mxu0 0.0
    %223 = vmatpush1.msra.mxu0 0.0
    %224 = vmatprep.subr.mxu0 0.0
    %225 = vmatpush1.msra.mxu0 0.0
    %226 = vmatprep.subr.mxu0 0.0
    %227 = vmatpush1.msra.mxu0 0.0
    %228 = vmatprep.subr.mxu0 0.0
    %229 = vmatpush1.msra.mxu0 0.0
    %230 = vmatprep.subr.mxu0 0.0
    %231 = vmatpush1.msra.mxu0 0.0
    %232 = vmatprep.subr.mxu0 0.0
    %233 = vmatpush1.msra.mxu0 0.0
    %234 = vmatprep.mubr.f32.mxu0 0.0
    %235 = vmatmul.mubr.f32.gmra.mrb[0].mxu0 %v165
    %v236 = vpop.f32.mrb[0].mxu0
    %v237 = vadd.f32 0.0, %v236
    %v238 = vpop.f32.mrb[0].mxu0
    %239 = vmatprep.mubr.f32.mxu0 0.0
    %240 = vmatmul.mubr.f32.gmra.mrb[0].mxu0 %v168
    %v241 = vpop.f32.mrb[0].mxu0
    %v242 = vadd.f32 0.0, %v241
    %v243 = vpop.f32.mrb[0].mxu0
    %244 = vdwg.mxu0
    %v245 = vmul.f32 %v237, 1.442695
    %v246 = vpow.pop %v245
    %v247 = vmul.f32 %v242, 1.442695
    %v248 = vpow.pop %v247
    %vm249 = vcmask 64512
    %v250 = vsel %vm249, %v246, 0.0
    %v251 = vrot.slane %v250, 4
    %v252 = vadd.f32 %v250, %v251
    %v253 = vrot.slane %v252, 2
    %v254 = vadd.f32 %v252, %v253
    %v255 = vrot.slane %v254, 1
    %v256 = vadd.f32 %v254, %v255
    %v257 = vsel %vm249, %v248, 0.0
    %v258 = vrot.slane %v257, 4
    %v259 = vadd.f32 %v257, %v258
    %v260 = vrot.slane %v259, 2
    %v261 = vadd.f32 %v259, %v260
    %v262 = vrot.slane %v261, 1
    %v263 = vadd.f32 %v261, %v262
    %v264 = vrcp.pop %v256
    %v265 = vrcp.pop %v263
    %v266 = vmul.f32 %v246, %v264
    %v267 = vmul.f32 %v248, %v265
    %v268 = vsel %vm249, %v266, 0.0
    %269 = vadd.xlane.f32.xlu0 %v268
    %v270 = vpop.xlane.xlu0 %269
    %v271 = vsel %vm249, %v267, 0.0
    %272 = vadd.xlane.f32.xlu0 %v271
    %v273 = vpop.xlane.xlu0 %272
    %v274 = vmul.f32 %v270, 0.125
    %v275 = vmul.f32 %v273, 0.125
    %v276 = vmul.f32 %v274, %v71
    %v277 = vmul.f32 %v275, %v72
    %v278 = vsel %vm79, %v276, 0.0
    %v279 = vrot.slane %v278, 4
    %v280 = vadd.f32 %v278, %v279
    %v281 = vrot.slane %v280, 2
    %v282 = vadd.f32 %v280, %v281
    %v283 = vrot.slane %v282, 1
    %v284 = vadd.f32 %v282, %v283
    %v285 = vsel %vm79, %v277, 0.0
    %v286 = vrot.slane %v285, 4
    %v287 = vadd.f32 %v285, %v286
    %v288 = vrot.slane %v287, 2
    %v289 = vadd.f32 %v287, %v288
    %v290 = vrot.slane %v289, 1
    %v291 = vadd.f32 %v289, %v290
    %v292 = vld [vmem:[%s0] sm:$0x3]
    %v293 = vld [vmem:[%s5] sm:$0xff]
    %v294 = vld [vmem:[%s5 + $0x8] sm:$0xff]
    %v295 = vld [vmem:[%s5 + $0x10] sm:$0xff]
    %v296 = vld [vmem:[%s5 + $0x18] sm:$0xff]
    %v297 = vld [vmem:[%s8] sm:$0x1]
    %v299 = vlaneseq
    %v300 = vshrl.u32 %v299, 7
    %v301 = vsub.s32 0, %v300
    %v302 = vrot.slane %v297, %v301
    %v305 = vsel %vm79, %v292, 0
    %307 = vmatprep.subr.mxu0 0.0
    %308 = vmatpush1.msra.mxu0 %v293
    %309 = vmatprep.subr.mxu0 0.0
    %310 = vmatpush1.msra.mxu0 %v294
    %311 = vmatprep.subr.mxu0 0.0
    %312 = vmatpush1.msra.mxu0 %v295
    %313 = vmatprep.subr.mxu0 0.0
    %314 = vmatpush1.msra.mxu0 %v296
    %315 = vmatprep.subr.mxu0 0.0
    %316 = vmatpush1.msra.mxu0 0.0
    %317 = vmatprep.subr.mxu0 0.0
    %318 = vmatpush1.msra.mxu0 0.0
    %319 = vmatprep.subr.mxu0 0.0
    %320 = vmatpush1.msra.mxu0 0.0
    %321 = vmatprep.subr.mxu0 0.0
    %322 = vmatpush1.msra.mxu0 0.0
    %323 = vmatprep.subr.mxu0 0.0
    %324 = vmatpush1.msra.mxu0 0.0
    %325 = vmatprep.subr.mxu0 0.0
    %326 = vmatpush1.msra.mxu0 0.0
    %327 = vmatprep.subr.mxu0 0.0
    %328 = vmatpush1.msra.mxu0 0.0
    %329 = vmatprep.subr.mxu0 0.0
    %330 = vmatpush1.msra.mxu0 0.0
    %331 = vmatprep.subr.mxu0 0.0
    %332 = vmatpush1.msra.mxu0 0.0
    %333 = vmatprep.subr.mxu0 0.0
    %334 = vmatpush1.msra.mxu0 0.0
    %335 = vmatprep.subr.mxu0 0.0
    %336 = vmatpush1.msra.mxu0 0.0
    %337 = vmatprep.subr.mxu0 0.0
    %338 = vmatpush1.msra.mxu0 0.0
    %339 = vmatprep.subr.mxu0 0.0
    %340 = vmatpush1.msra.mxu0 0.0
    %341 = vmatprep.subr.mxu0 0.0
    %342 = vmatpush1.msra.mxu0 0.0
    %343 = vmatprep.subr.mxu0 0.0
    %344 = vmatpush1.msra.mxu0 0.0
    %345 = vmatprep.subr.mxu0 0.0
    %346 = vmatpush1.msra.mxu0 0.0
    %347 = vmatprep.subr.mxu0 0.0
    %348 = vmatpush1.msra.mxu0 0.0
    %349 = vmatprep.subr.mxu0 0.0
    %350 = vmatpush1.msra.mxu0 0.0
    %351 = vmatprep.subr.mxu0 0.0
    %352 = vmatpush1.msra.mxu0 0.0
    %353 = vmatprep.subr.mxu0 0.0
    %354 = vmatpush1.msra.mxu0 0.0
    %355 = vmatprep.subr.mxu0 0.0
    %356 = vmatpush1.msra.mxu0 0.0
    %357 = vmatprep.subr.mxu0 0.0
    %358 = vmatpush1.msra.mxu0 0.0
    %359 = vmatprep.subr.mxu0 0.0
    %360 = vmatpush1.msra.mxu0 0.0
    %361 = vmatprep.subr.mxu0 0.0
    %362 = vmatpush1.msra.mxu0 0.0
    %363 = vmatprep.subr.mxu0 0.0
    %364 = vmatpush1.msra.mxu0 0.0
    %365 = vmatprep.subr.mxu0 0.0
    %366 = vmatpush1.msra.mxu0 0.0
    %367 = vmatprep.subr.mxu0 0.0
    %368 = vmatpush1.msra.mxu0 0.0
    %369 = vmatprep.subr.mxu0 0.0
    %370 = vmatpush1.msra.mxu0 0.0
    %371 = vmatprep.mubr.f32.mxu0 0.0
    %372 = vmatmul.mubr.f32.gmra.mrb[0].mxu0 %v305
    %v373 = vpop.f32.mrb[0].mxu0
    %v374 = vadd.f32 %v302, %v373
    %v375 = vpop.f32.mrb[0].mxu0
    %376 = vdwg.mxu0
    %v377 = vld [vmem:[%s6] sm:$0xff]
    %v378 = vld [vmem:[%s6 + $0x8] sm:$0xff]
    %v379 = vld [vmem:[%s6 + $0x10] sm:$0xff]
    %v380 = vld [vmem:[%s6 + $0x18] sm:$0xff]
    %vm383 = vcmask 1041409
    %v384 = vsel %vm383, %v291, %v284
    %v385 = vsel %vm79, %v384, 0
    %387 = vmatprep.subr.mxu0 0.0
    %388 = vmatpush1.msra.mxu0 %v377
    %389 = vmatprep.subr.mxu0 0.0
    %390 = vmatpush1.msra.mxu0 %v378
    %391 = vmatprep.subr.mxu0 0.0
    %392 = vmatpush1.msra.mxu0 %v379
    %393 = vmatprep.subr.mxu0 0.0
    %394 = vmatpush1.msra.mxu0 %v380
    %395 = vmatprep.subr.mxu0 0.0
    %396 = vmatpush1.msra.mxu0 0.0
    %397 = vmatprep.subr.mxu0 0.0
    %398 = vmatpush1.msra.mxu0 0.0
    %399 = vmatprep.subr.mxu0 0.0
    %400 = vmatpush1.msra.mxu0 0.0
    %401 = vmatprep.subr.mxu0 0.0
    %402 = vmatpush1.msra.mxu0 0.0
    %403 = vmatprep.subr.mxu0 0.0
    %404 = vmatpush1.msra.mxu0 0.0
    %405 = vmatprep.subr.mxu0 0.0
    %406 = vmatpush1.msra.mxu0 0.0
    %407 = vmatprep.subr.mxu0 0.0
    %408 = vmatpush1.msra.mxu0 0.0
    %409 = vmatprep.subr.mxu0 0.0
    %410 = vmatpush1.msra.mxu0 0.0
    %411 = vmatprep.subr.mxu0 0.0
    %412 = vmatpush1.msra.mxu0 0.0
    %413 = vmatprep.subr.mxu0 0.0
    %414 = vmatpush1.msra.mxu0 0.0
    %415 = vmatprep.subr.mxu0 0.0
    %416 = vmatpush1.msra.mxu0 0.0
    %417 = vmatprep.subr.mxu0 0.0
    %418 = vmatpush1.msra.mxu0 0.0
    %419 = vmatprep.subr.mxu0 0.0
    %420 = vmatpush1.msra.mxu0 0.0
    %421 = vmatprep.subr.mxu0 0.0
    %422 = vmatpush1.msra.mxu0 0.0
    %423 = vmatprep.subr.mxu0 0.0
    %424 = vmatpush1.msra.mxu0 0.0
    %425 = vmatprep.subr.mxu0 0.0
    %426 = vmatpush1.msra.mxu0 0.0
    %427 = vmatprep.subr.mxu0 0.0
    %428 = vmatpush1.msra.mxu0 0.0
    %429 = vmatprep.subr.mxu0 0.0
    %430 = vmatpush1.msra.mxu0 0.0
    %431 = vmatprep.subr.mxu0 0.0
    %432 = vmatpush1.msra.mxu0 0.0
    %433 = vmatprep.subr.mxu0 0.0
    %434 = vmatpush1.msra.mxu0 0.0
    %435 = vmatprep.subr.mxu0 0.0
    %436 = vmatpush1.msra.mxu0 0.0
    %437 = vmatprep.subr.mxu0 0.0
    %438 = vmatpush1.msra.mxu0 0.0
    %439 = vmatprep.subr.mxu0 0.0
    %440 = vmatpush1.msra.mxu0 0.0
    %441 = vmatprep.subr.mxu0 0.0
    %442 = vmatpush1.msra.mxu0 0.0
    %443 = vmatprep.subr.mxu0 0.0
    %444 = vmatpush1.msra.mxu0 0.0
    %445 = vmatprep.subr.mxu0 0.0
    %446 = vmatpush1.msra.mxu0 0.0
    %447 = vmatprep.subr.mxu0 0.0
    %448 = vmatpush1.msra.mxu0 0.0
    %449 = vmatprep.subr.mxu0 0.0
    %450 = vmatpush1.msra.mxu0 0.0
    %451 = vmatprep.mubr.f32.mxu0 0.0
    %452 = vmatmul.mubr.f32.gmra.mrb[0].mxu0 %v385
    %v453 = vpop.f32.mrb[0].mxu0
    %v454 = vadd.f32 0.0, %v453
    %v455 = vpop.f32.mrb[0].mxu0
    %456 = vdwg.mxu0
    %v457 = vadd.f32 %v374, %v454
    %v458 = vld [vmem:[#allocation5] sm:$0x3]
    %v459 = vld [vmem:[%s7] sm:$0xff]
    %v460 = vld [vmem:[%s7 + $0x8] sm:$0xff]
    %v461 = vld [vmem:[%s7 + $0x10] sm:$0xff]
    %v462 = vld [vmem:[%s7 + $0x18] sm:$0xff]
    %v464 = vsel %vm79, %v458, 0
    %466 = vmatprep.subr.mxu0 0.0
    %467 = vmatpush1.msra.mxu0 %v459
    %468 = vmatprep.subr.mxu0 0.0
    %469 = vmatpush1.msra.mxu0 %v460
    %470 = vmatprep.subr.mxu0 0.0
    %471 = vmatpush1.msra.mxu0 %v461
    %472 = vmatprep.subr.mxu0 0.0
    %473 = vmatpush1.msra.mxu0 %v462
    %474 = vmatprep.subr.mxu0 0.0
    %475 = vmatpush1.msra.mxu0 0.0
    %476 = vmatprep.subr.mxu0 0.0
    %477 = vmatpush1.msra.mxu0 0.0
    %478 = vmatprep.subr.mxu0 0.0
    %479 = vmatpush1.msra.mxu0 0.0
    %480 = vmatprep.subr.mxu0 0.0
    %481 = vmatpush1.msra.mxu0 0.0
    %482 = vmatprep.subr.mxu0 0.0
    %483 = vmatpush1.msra.mxu0 0.0
    %484 = vmatprep.subr.mxu0 0.0
    %485 = vmatpush1.msra.mxu0 0.0
    %486 = vmatprep.subr.mxu0 0.0
    %487 = vmatpush1.msra.mxu0 0.0
    %488 = vmatprep.subr.mxu0 0.0
    %489 = vmatpush1.msra.mxu0 0.0
    %490 = vmatprep.subr.mxu0 0.0
    %491 = vmatpush1.msra.mxu0 0.0
    %492 = vmatprep.subr.mxu0 0.0
    %493 = vmatpush1.msra.mxu0 0.0
    %494 = vmatprep.subr.mxu0 0.0
    %495 = vmatpush1.msra.mxu0 0.0
    %496 = vmatprep.subr.mxu0 0.0
    %497 = vmatpush1.msra.mxu0 0.0
    %498 = vmatprep.subr.mxu0 0.0
    %499 = vmatpush1.msra.mxu0 0.0
    %500 = vmatprep.subr.mxu0 0.0
    %501 = vmatpush1.msra.mxu0 0.0
    %502 = vmatprep.subr.mxu0 0.0
    %503 = vmatpush1.msra.mxu0 0.0
    %504 = vmatprep.subr.mxu0 0.0
    %505 = vmatpush1.msra.mxu0 0.0
    %506 = vmatprep.subr.mxu0 0.0
    %507 = vmatpush1.msra.mxu0 0.0
    %508 = vmatprep.subr.mxu0 0.0
    %509 = vmatpush1.msra.mxu0 0.0
    %510 = vmatprep.subr.mxu0 0.0
    %511 = vmatpush1.msra.mxu0 0.0
    %512 = vmatprep.subr.mxu0 0.0
    %513 = vmatpush1.msra.mxu0 0.0
    %514 = vmatprep.subr.mxu0 0.0
    %515 = vmatpush1.msra.mxu0 0.0
    %516 = vmatprep.subr.mxu0 0.0
    %517 = vmatpush1.msra.mxu0 0.0
    %518 = vmatprep.subr.mxu0 0.0
    %519 = vmatpush1.msra.mxu0 0.0
    %520 = vmatprep.subr.mxu0 0.0
    %521 = vmatpush1.msra.mxu0 0.0
    %522 = vmatprep.subr.mxu0 0.0
    %523 = vmatpush1.msra.mxu0 0.0
    %524 = vmatprep.subr.mxu0 0.0
    %525 = vmatpush1.msra.mxu0 0.0
    %526 = vmatprep.subr.mxu0 0.0
    %527 = vmatpush1.msra.mxu0 0.0
    %528 = vmatprep.subr.mxu0 0.0
    %529 = vmatpush1.msra.mxu0 0.0
    %530 = vmatprep.mubr.f32.mxu0 0.0
    %531 = vmatmul.mubr.f32.gmra.mrb[0].mxu0 %v464
    %v532 = vpop.f32.mrb[0].mxu0
    %v533 = vadd.f32 0.0, %v532
    %v534 = vpop.f32.mrb[0].mxu0
    %535 = vdwg.mxu0
    %v536 = vadd.f32 %v457, %v533
    %v537 = vld [vmem:[%s9] sm:$0xff]
    %v538 = vld [vmem:[%s9 + $0x8] sm:$0xff]
    %v539 = vld [vmem:[%s9 + $0x10] sm:$0xff]
    %v540 = vld [vmem:[%s9 + $0x18] sm:$0xff]
    %v541 = vld [vmem:[%s10] sm:$0x1]
    %v542 = vld [vmem:[%s11] sm:$0xff]
    %v543 = vld [vmem:[%s11 + $0x8] sm:$0xff]
    %v544 = vld [vmem:[%s11 + $0x10] sm:$0xff]
    %v545 = vld [vmem:[%s11 + $0x18] sm:$0xff]
    %v546 = vld [vmem:[%s12] sm:$0x1]
    %v547 = vmax.f32 %v536, 0.0
    %v549 = vlaneseq
    %v550 = vshrl.u32 %v549, 7
    %v551 = vsub.s32 0, %v550
    %v552 = vrot.slane %v541, %v551
    %v555 = vsel %vm79, %v547, 0
    %557 = vmatprep.subr.mxu0 0.0
    %558 = vmatpush1.msra.mxu0 %v537
    %559 = vmatprep.subr.mxu0 0.0
    %560 = vmatpush1.msra.mxu0 %v538
    %561 = vmatprep.subr.mxu0 0.0
    %562 = vmatpush1.msra.mxu0 %v539
    %563 = vmatprep.subr.mxu0 0.0
    %564 = vmatpush1.msra.mxu0 %v540
    %565 = vmatprep.subr.mxu0 0.0
    %566 = vmatpush1.msra.mxu0 0.0
    %567 = vmatprep.subr.mxu0 0.0
    %568 = vmatpush1.msra.mxu0 0.0
    %569 = vmatprep.subr.mxu0 0.0
    %570 = vmatpush1.msra.mxu0 0.0
    %571 = vmatprep.subr.mxu0 0.0
    %572 = vmatpush1.msra.mxu0 0.0
    %573 = vmatprep.subr.mxu0 0.0
    %574 = vmatpush1.msra.mxu0 0.0
    %575 = vmatprep.subr.mxu0 0.0
    %576 = vmatpush1.msra.mxu0 0.0
    %577 = vmatprep.subr.mxu0 0.0
    %578 = vmatpush1.msra.mxu0 0.0
    %579 = vmatprep.subr.mxu0 0.0
    %580 = vmatpush1.msra.mxu0 0.0
    %581 = vmatprep.subr.mxu0 0.0
    %582 = vmatpush1.msra.mxu0 0.0
    %583 = vmatprep.subr.mxu0 0.0
    %584 = vmatpush1.msra.mxu0 0.0
    %585 = vmatprep.subr.mxu0 0.0
    %586 = vmatpush1.msra.mxu0 0.0
    %587 = vmatprep.subr.mxu0 0.0
    %588 = vmatpush1.msra.mxu0 0.0
    %589 = vmatprep.subr.mxu0 0.0
    %590 = vmatpush1.msra.mxu0 0.0
    %591 = vmatprep.subr.mxu0 0.0
    %592 = vmatpush1.msra.mxu0 0.0
    %593 = vmatprep.subr.mxu0 0.0
    %594 = vmatpush1.msra.mxu0 0.0
    %595 = vmatprep.subr.mxu0 0.0
    %596 = vmatpush1.msra.mxu0 0.0
    %597 = vmatprep.subr.mxu0 0.0
    %598 = vmatpush1.msra.mxu0 0.0
    %599 = vmatprep.subr.mxu0 0.0
    %600 = vmatpush1.msra.mxu0 0.0
    %601 = vmatprep.subr.mxu0 0.0
    %602 = vmatpush1.msra.mxu0 0.0
    %603 = vmatprep.subr.mxu0 0.0
    %604 = vmatpush1.msra.mxu0 0.0
    %605 = vmatprep.subr.mxu0 0.0
    %606 = vmatpush1.msra.mxu0 0.0
    %607 = vmatprep.subr.mxu0 0.0
    %608 = vmatpush1.msra.mxu0 0.0
    %609 = vmatprep.subr.mxu0 0.0
    %610 = vmatpush1.msra.mxu0 0.0
    %611 = vmatprep.subr.mxu0 0.0
    %612 = vmatpush1.msra.mxu0 0.0
    %613 = vmatprep.subr.mxu0 0.0
    %614 = vmatpush1.msra.mxu0 0.0
    %615 = vmatprep.subr.mxu0 0.0
    %616 = vmatpush1.msra.mxu0 0.0
    %617 = vmatprep.subr.mxu0 0.0
    %618 = vmatpush1.msra.mxu0 0.0
    %619 = vmatprep.subr.mxu0 0.0
    %620 = vmatpush1.msra.mxu0 0.0
    %621 = vmatprep.mubr.f32.mxu0 0.0
    %622 = vmatmul.mubr.f32.gmra.mrb[0].mxu0 %v555
    %v623 = vpop.f32.mrb[0].mxu0
    %v624 = vadd.f32 %v552, %v623
    %v625 = vpop.f32.mrb[0].mxu0
    %626 = vdwg.mxu0
    %v627 = vmax.f32 %v624, 0.0
    %v629 = vlaneseq
    %v630 = vshrl.u32 %v629, 7
    %v631 = vsub.s32 0, %v630
    %v632 = vrot.slane %v546, %v631
    %v635 = vsel %vm79, %v627, 0
    %637 = vmatprep.subr.mxu0 0.0
    %638 = vmatpush1.msra.mxu0 %v542
    %639 = vmatprep.subr.mxu0 0.0
    %640 = vmatpush1.msra.mxu0 %v543
    %641 = vmatprep.subr.mxu0 0.0
    %642 = vmatpush1.msra.mxu0 %v544
    %643 = vmatprep.subr.mxu0 0.0
    %644 = vmatpush1.msra.mxu0 %v545
    %645 = vmatprep.subr.mxu0 0.0
    %646 = vmatpush1.msra.mxu0 0.0
    %647 = vmatprep.subr.mxu0 0.0
    %648 = vmatpush1.msra.mxu0 0.0
    %649 = vmatprep.subr.mxu0 0.0
    %650 = vmatpush1.msra.mxu0 0.0
    %651 = vmatprep.subr.mxu0 0.0
    %652 = vmatpush1.msra.mxu0 0.0
    %653 = vmatprep.subr.mxu0 0.0
    %654 = vmatpush1.msra.mxu0 0.0
    %655 = vmatprep.subr.mxu0 0.0
    %656 = vmatpush1.msra.mxu0 0.0
    %657 = vmatprep.subr.mxu0 0.0
    %658 = vmatpush1.msra.mxu0 0.0
    %659 = vmatprep.subr.mxu0 0.0
    %660 = vmatpush1.msra.mxu0 0.0
    %661 = vmatprep.subr.mxu0 0.0
    %662 = vmatpush1.msra.mxu0 0.0
    %663 = vmatprep.subr.mxu0 0.0
    %664 = vmatpush1.msra.mxu0 0.0
    %665 = vmatprep.subr.mxu0 0.0
    %666 = vmatpush1.msra.mxu0 0.0
    %667 = vmatprep.subr.mxu0 0.0
    %668 = vmatpush1.msra.mxu0 0.0
    %669 = vmatprep.subr.mxu0 0.0
    %670 = vmatpush1.msra.mxu0 0.0
    %671 = vmatprep.subr.mxu0 0.0
    %672 = vmatpush1.msra.mxu0 0.0
    %673 = vmatprep.subr.mxu0 0.0
    %674 = vmatpush1.msra.mxu0 0.0
    %675 = vmatprep.subr.mxu0 0.0
    %676 = vmatpush1.msra.mxu0 0.0
    %677 = vmatprep.subr.mxu0 0.0
    %678 = vmatpush1.msra.mxu0 0.0
    %679 = vmatprep.subr.mxu0 0.0
    %680 = vmatpush1.msra.mxu0 0.0
    %681 = vmatprep.subr.mxu0 0.0
    %682 = vmatpush1.msra.mxu0 0.0
    %683 = vmatprep.subr.mxu0 0.0
    %684 = vmatpush1.msra.mxu0 0.0
    %685 = vmatprep.subr.mxu0 0.0
    %686 = vmatpush1.msra.mxu0 0.0
    %687 = vmatprep.subr.mxu0 0.0
    %688 = vmatpush1.msra.mxu0 0.0
    %689 = vmatprep.subr.mxu0 0.0
    %690 = vmatpush1.msra.mxu0 0.0
    %691 = vmatprep.subr.mxu0 0.0
    %692 = vmatpush1.msra.mxu0 0.0
    %693 = vmatprep.subr.mxu0 0.0
    %694 = vmatpush1.msra.mxu0 0.0
    %695 = vmatprep.subr.mxu0 0.0
    %696 = vmatpush1.msra.mxu0 0.0
    %697 = vmatprep.subr.mxu0 0.0
    %698 = vmatpush1.msra.mxu0 0.0
    %699 = vmatprep.subr.mxu0 0.0
    %700 = vmatpush1.msra.mxu0 0.0
    %701 = vmatprep.mubr.f32.mxu0 0.0
    %702 = vmatmul.mubr.f32.gmra.mrb[0].mxu0 %v635
    %v703 = vpop.f32.mrb[0].mxu0
    %v704 = vadd.f32 %v632, %v703
    %v705 = vpop.f32.mrb[0].mxu0
    %706 = vdwg.mxu0
    %v707 = vxor.u32 %v704, 2147483648
    %v708 = vmul.f32 %v707, 1.442695
    %v709 = vpow.pop %v708
    %v710 = vadd.f32 %v709, 1.0
    %v711 = vrcp.pop %v710
    %v712 = vmul.f32 1.0, %v711
    %714 = vrot.lane.b32.xlu0 %v712, 32
    %v715 = vpop.permute.xlu0 %714
    %v717 = vsel %vm79, %v547, %v715
    %vm718 = vcmask 326656
    %v719 = vsel %vm718, %v717, 0.0
    %720 = vst [vmem:[#allocation7] sm:$0x3] %v719
    // Predicated region
    $region62: #{tpu_custom_call.1} parent=1 // pred_check
      _
    $region63: #{tpu_custom_call.1} parent=1 // pred_check_branch
      %722 = sbr.rel (0) target = $region65
    $region64: #{tpu_custom_call.1} parent=1 // pred_region
      %s724 = ssub.s32 32, 32
      %725 = vsyncadd [#allocation4], %s724
      %s727 = sshll.u32 [#allocation7], 4
      %s728 = int_to_ptr.vmem [resolvable:$true] %s727
      %730 = dma.vmem_to_hbm [thread:$0]  %s728, 32, %s13, [#allocation4]
    $region65: #{tpu_custom_call.1} parent=1 // pred_fallthru
      _
    // Predicated region
    $region66: #{tpu_custom_call.1} parent=1 // pred_check
      _
    $region67: #{tpu_custom_call.1} parent=1 // pred_check_branch
      %732 = sbr.rel (0) target = $region69
    $region68: #{tpu_custom_call.1} parent=1 // pred_region
      %733 = dma.done [#allocation4], 32
    $region69: #{tpu_custom_call.1} parent=1 // pred_fallthru
      _
    %734 = vsyncpa [#allocation3], 1
    %735 = vsyncpa [#allocation6], 1
    %736 = vsyncpa [#allocation4], 1

</llo_original>
